<compile_context>
chip_gen: v7x
topology: tpu7x:2x2x1
jax: 0.10.0
libtpu: 0.0.40
codegen_flags: <defaults>
</compile_context>

<pallas_src>
import jax
import jax.numpy as jnp
import numpy as np
from jax.experimental import pallas as pl
from jax.experimental.pallas import tpu as pltpu


# ----------------------------------------------------------------------------
# Pallas kernel: out[y, c] = col_const[c] + y * col_ystride[c]
# ----------------------------------------------------------------------------
def _anchor_kernel(col_ref, out_ref):
    """col_ref: (2, C) f32 VMEM  row 0 = base_coord + x*stride_w per column
                                 row 1 = stride_h for y-coordinate columns, else 0
       out_ref: (tile_h, C) f32 VMEM with C = grid_w * A * 4 (lane-dense)."""
    tile_h, _ = out_ref.shape
    y0 = pl.program_id(0) * tile_h
    # y varies only along sublanes -> tiny (tile_h, 1) iota, broadcast over lanes.
    y = (jax.lax.broadcasted_iota(jnp.int32, (tile_h, 1), 0) + y0).astype(jnp.float32)
    cols = col_ref[...]
    out_ref[...] = cols[0:1, :] + y * cols[1:2, :]


# ----------------------------------------------------------------------------
# Chip-aware tiling
# ----------------------------------------------------------------------------
def _chip_tuning():
    """(min parallel grid steps, per-block byte cap) per TPU generation."""
    try:
        kind = jax.devices()[0].device_kind.lower()
    except Exception:
        kind = ""
    if "v7" in kind or "tpu7" in kind:
        return 4, 2 << 20            # 2 TCs/chip: >=2 pipeline stages per core
    if "v5 lite" in kind or "v5e" in kind or "v5lite" in kind:
        return 2, 4 << 20            # 1 TC, 16 MiB default scoped VMEM
    return 2, 8 << 20                # v6e & default: 1 TC, 32 MiB scoped VMEM


def _pick_tile_h(grid_h, c_dim, min_steps, block_cap_bytes):
    """Sublane-aligned row tile: >= min_steps grid steps, block <= block_cap_bytes."""
    if grid_h <= 8:
        return grid_h                          # block dim == full dim is always legal
    t = pl.cdiv(grid_h, min_steps)
    cap = max(8, block_cap_bytes // (4 * c_dim))
    t = max(8, min(t, cap))
    return ((t + 7) // 8) * 8                  # multiple of 8 sublanes


# ----------------------------------------------------------------------------
# Per-level anchor generation
# ----------------------------------------------------------------------------
def _column_table(base, grid_w, stride_h, stride_w):
    """(2, grid_w*A*4) per-column constants, computed at trace time on the host."""
    a = base.shape[0]
    c_dim = grid_w * a * 4
    c = np.arange(c_dim)
    coord = c % 4                                        # x1, y1, x2, y2
    x_idx = c // (a * 4)                                 # grid x of this column
    is_x = (coord % 2) == 0
    col_base = base.reshape(-1)[c % (a * 4)]
    col_const = (col_base + np.where(is_x, x_idx * float(stride_w), 0.0)).astype(np.float32)
    col_ystride = np.where(is_x, 0.0, float(stride_h)).astype(np.float32)
    return np.stack([col_const, col_ystride], axis=0)


def grid_anchors_pallas(base_anchors, grid_h, grid_w, stride_h, stride_w):
    """Anchors of one feature level: (grid_h*grid_w*A, 4) float32, torch order."""
    base = np.asarray(base_anchors, np.float32)          # (A, 4)
    a = base.shape[0]
    c_dim = grid_w * a * 4
    col_tbl = jnp.asarray(_column_table(base, grid_w, stride_h, stride_w))   # (2, C)

    min_steps, cap_bytes = _chip_tuning()
    tile_h = _pick_tile_h(grid_h, c_dim, min_steps, cap_bytes)

    out = pl.pallas_call(
        _anchor_kernel,
        out_shape=jax.ShapeDtypeStruct((grid_h, c_dim), jnp.float32),
        grid=(pl.cdiv(grid_h, tile_h),),
        in_specs=[pl.BlockSpec((2, c_dim), lambda i: (0, 0))],
        out_specs=pl.BlockSpec((tile_h, c_dim), lambda i: (i, 0)),
        compiler_params=pltpu.CompilerParams(dimension_semantics=("parallel",)),
        cost_estimate=pl.CostEstimate(
            flops=2 * grid_h * c_dim,
            transcendentals=0,
            bytes_accessed=4 * grid_h * c_dim + 8 * c_dim),
    )(col_tbl)

    # Row-major (H, W*A*4) -> (H*W*A, 4): identical element order to torch,
    # so this reshape is pure layout (no data movement).
    return out.reshape(-1, 4)


_SMALL_LEVEL_ELEMS = 1024   # below this, a kernel launch costs more than it saves


def _host_level_anchors(base, grid_h, grid_w, stride_h, stride_w):
    """Tiny levels: pure shape-dependent constant, built on the host."""
    sx = np.arange(grid_w, dtype=np.float32) * np.float32(stride_w)
    sy = np.arange(grid_h, dtype=np.float32) * np.float32(stride_h)
    gy, gx = np.meshgrid(sy, sx, indexing="ij")
    gx = gx.reshape(-1)
    gy = gy.reshape(-1)
    shifts = np.stack([gx, gy, gx, gy], axis=1)
    return (shifts[:, None, :] + base[None, :, :]).reshape(-1, 4).astype(np.float32)


def level_anchors(base, grid_h, grid_w, stride_h, stride_w):
    if grid_h * grid_w * base.shape[0] * 4 <= _SMALL_LEVEL_ELEMS:
        return jnp.asarray(_host_level_anchors(base, grid_h, grid_w, stride_h, stride_w))
    return grid_anchors_pallas(base, grid_h, grid_w, stride_h, stride_w)


# ----------------------------------------------------------------------------
# Host-side parameter setup, mirroring the PyTorch module
# ----------------------------------------------------------------------------
def generate_base_anchors(sizes, aspect_ratios):
    sizes = np.asarray(sizes, np.float32)
    ar = np.asarray(aspect_ratios, np.float32)
    h_ratios = np.sqrt(ar)
    w_ratios = 1.0 / h_ratios
    hs = (h_ratios[:, None] * sizes[None, :]).reshape(-1)
    ws = (w_ratios[:, None] * sizes[None, :]).reshape(-1)
    base = np.stack([-ws, -hs, ws, hs], axis=1)
    return np.round(base).astype(np.float32)   # round-half-to-even, like torch.round


class AnchorsGeneratorPallas:
    """Forward-pass equivalent of the PyTorch AnchorsGenerator."""

    def __init__(self, size=(128, 256, 512), aspect_ratios=(0.5, 1.0, 2.0)):
        if not isinstance(size[0], (list, tuple)):
            size = tuple((s,) for s in size)
        if not isinstance(aspect_ratios[0], (list, tuple)):
            aspect_ratios = (aspect_ratios,) * len(size)
        self.size = size
        self.aspect_ratios = aspect_ratios
        self.cell_anchors = [
            generate_base_anchors(s, ar) for s, ar in zip(size, aspect_ratios)
        ]
        # (image_size, grid_sizes) -> concatenated (N, 4) device array.
        # Anchors are a pure function of shapes, so repeated forwards with the same
        # shapes (the normal detection case) do zero device work.
        self._cache = {}

    def num_anchors_per_location(self):
        return [len(s) * len(a) for s, a in zip(self.size, self.aspect_ratios)]

    def __call__(self, image_tensors, image_sizes, feature_maps):
        grid_sizes = tuple(tuple(int(d) for d in fm.shape[-2:]) for fm in feature_maps)
        image_size = tuple(int(d) for d in image_tensors.shape[-2:])
        key = (image_size, grid_sizes)
        all_anchors = self._cache.get(key)
        if all_anchors is None:
            # torch: tensor(image_size / gs, dtype=int64) -> truncation
            strides = [
                (int(image_size[0] / gh), int(image_size[1] / gw))
                for gh, gw in grid_sizes
            ]
            per_level = [
                level_anchors(base, gh, gw, sh, sw)
                for base, (gh, gw), (sh, sw) in zip(self.cell_anchors, grid_sizes, strides)
            ]
            all_anchors = (
                per_level[0] if len(per_level) == 1 else jnp.concatenate(per_level, axis=0)
            )
            self._cache[key] = all_anchors
        # Anchors are identical for every image, exactly like the PyTorch module's
        # per-image torch.cat of the same per-level tensors.
        return [all_anchors for _ in range(len(image_sizes))]


# ----------------------------------------------------------------------------
# Pure reference (direct transcription of the torch math) for verification
# ----------------------------------------------------------------------------
def _reference_grid_anchors(base, grid_h, grid_w, stride_h, stride_w):
    base = np.asarray(base, np.float32)
    shifts_x = np.arange(grid_w, dtype=np.float32) * np.float32(stride_w)
    shifts_y = np.arange(grid_h, dtype=np.float32) * np.float32(stride_h)
    sy, sx = np.meshgrid(shifts_y, shifts_x, indexing="ij")
    sx = sx.reshape(-1)
    sy = sy.reshape(-1)
    shifts = np.stack([sx, sy, sx, sy], axis=1)
    return (shifts[:, None, :] + base[None, :, :]).reshape(-1, 4)


if __name__ == "__main__":
    key = jax.random.PRNGKey(0)
    k_img, k_f0, k_f1, k_f2 = jax.random.split(key, 4)

    # Small synthetic inputs (NCHW, like the PyTorch module expects).
    images = jax.random.normal(k_img, (2, 3, 96, 96), dtype=jnp.float32)
    image_sizes = [(96, 96), (90, 92)]
    feature_maps = [
        jax.random.normal(k_f0, (2, 4, 24, 24), dtype=jnp.float32),  # stride 4: Pallas, ragged tail tile
        jax.random.normal(k_f1, (2, 4, 12, 12), dtype=jnp.float32),  # stride 8: Pallas, ragged tail tile
        jax.random.normal(k_f2, (2, 4, 6, 6), dtype=jnp.float32),    # stride 16: host-folded tiny level
    ]

    gen = AnchorsGeneratorPallas(size=(32, 64, 128), aspect_ratios=(0.5, 1.0, 2.0))
    anchors = gen(images, image_sizes, feature_maps)
    anchors = [jax.block_until_ready(a) for a in anchors]

    # Second forward with identical shapes: served from the shape-keyed cache.
    anchors_again = gen(images, image_sizes, feature_maps)
    anchors_again = [jax.block_until_ready(a) for a in anchors_again]

    # Sanity check against a direct transcription of the torch forward.
    grid_sizes = [tuple(int(d) for d in fm.shape[-2:]) for fm in feature_maps]
    strides = [(int(96 / gh), int(96 / gw)) for gh, gw in grid_sizes]
    ref = np.concatenate(
        [
            _reference_grid_anchors(generate_base_anchors(s, ar), gh, gw, sh, sw)
            for s, ar, (gh, gw), (sh, sw) in zip(
                gen.size, gen.aspect_ratios, grid_sizes, strides
            )
        ],
        axis=0,
    )

    expected_rows = sum(gh * gw * 3 for gh, gw in grid_sizes)  # A = 1 size * 3 ratios per level
    assert len(anchors) == len(image_sizes)
    assert anchors[0].shape == (expected_rows, 4), anchors[0].shape
    np.testing.assert_allclose(np.asarray(anchors[0]), ref, atol=1e-5)
    np.testing.assert_allclose(np.asarray(anchors[1]), ref, atol=1e-5)
    np.testing.assert_allclose(np.asarray(anchors_again[0]), ref, atol=1e-5)
    np.testing.assert_allclose(np.asarray(anchors_again[1]), ref, atol=1e-5)

    print("KERNEL_OK")
</pallas_src>

<mosaic_0001>
module attributes {stable_mosaic.version = 11 : i64} {
  func.func @_anchor_kernel(%arg0: i32, %arg1: memref<2x288xf32, #tpu.memory_space<vmem>>, %arg2: memref<16x288xf32, #tpu.memory_space<vmem>>) attributes {dimension_semantics = [#tpu.dimension_semantics<parallel>], iteration_bounds = array<i64: 2>, scalar_prefetch = 0 : i64, scratch_operands = 0 : i64, tpu.core_type = #tpu.core_type<tc>, window_params = [{pipeline_mode = #tpu.pipeline_mode<synchronous>, transform_indices = @transform_0, window_bounds = array<i64: 2, 288>}, {transform_indices = @transform_1, window_bounds = array<i64: 16, 288>}]} {
    %c16_i32 = arith.constant 16 : i32
    %0 = arith.muli %arg0, %c16_i32 : i32
    %1 = tpu.iota {dimensions = array<i32: 0>} : vector<16x1xi32>
    %2 = vector.broadcast %0 : i32 to vector<16x1xi32>
    %3 = arith.addi %1, %2 : vector<16x1xi32>
    %4 = arith.sitofp %3 : vector<16x1xi32> to vector<16x1xf32>
    %c0 = arith.constant 0 : index
    %c0_0 = arith.constant 0 : index
    %5 = vector.load %arg1[%c0, %c0_0] : memref<2x288xf32, #tpu.memory_space<vmem>>, vector<2x288xf32>
    %6 = vector.extract_strided_slice %5 {offsets = [0, 0], sizes = [1, 288], strides = [1, 1]} : vector<2x288xf32> to vector<1x288xf32>
    %7 = vector.extract_strided_slice %5 {offsets = [1, 0], sizes = [1, 288], strides = [1, 1]} : vector<2x288xf32> to vector<1x288xf32>
    %8 = vector.broadcast %4 : vector<16x1xf32> to vector<16x288xf32>
    %9 = vector.broadcast %7 : vector<1x288xf32> to vector<16x288xf32>
    %10 = arith.mulf %8, %9 : vector<16x288xf32>
    %11 = vector.broadcast %6 : vector<1x288xf32> to vector<16x288xf32>
    %12 = arith.addf %11, %10 : vector<16x288xf32>
    %c0_1 = arith.constant 0 : index
    %c0_2 = arith.constant 0 : index
    %13 = vector.load %arg2[%c0_1, %c0_2] : memref<16x288xf32, #tpu.memory_space<vmem>>, vector<16x288xf32>
    tpu.vector_store %arg2[%c0_1, %c0_2], %12 {strides = array<i32>} : memref<16x288xf32, #tpu.memory_space<vmem>>, vector<16x288xf32>,
    return
  }
  func.func @transform_0(%arg0: i32) -> (i32, i32) {
    %c0_i32 = arith.constant 0 : i32
    %c0_i32_0 = arith.constant 0 : i32
    %c0_i32_1 = arith.constant 0 : i32
    return %c0_i32, %c0_i32_0 : i32, i32
  }
  func.func @transform_1(%arg0: i32) -> (i32, i32) {
    %c0_i32 = arith.constant 0 : i32
    %c0_i32_0 = arith.constant 0 : i32
    return %arg0, %c0_i32 : i32, i32
  }
}

</mosaic_0001>

<llo_original>
// kernel: tpu_custom_call.1
$region0: #{tpu_custom_call.1}
  #allocation0 [shape = 'u32[]', space=smem, size = 0x4, offset = 0x4, fixed_abs, tag = 'smem constant byte address 0x4 - core index']
  #allocation1 [shape = 'u32[144,128]{1,0:T(1,128)}', space=vmem, size = 0x12000, scoped, tag = 'internal scratch']
  %s0 = inlined_call_operand.hbm [shape: f32[2,288], index: 0, kind: input, shape index: {}]
  %s1 = inlined_call_operand.hbm [shape: f32[24,288], index: 1, kind: output, shape index: {}]
  %s2 = sld [smem:[#allocation0]]
  $region41: #{tpu_custom_call.1} parent=0
    _
  %s4 = ssub.s32 1, %s2
  %s5 = scalar_select 0, %s4, %s2
  $region1: #{tpu_custom_call.1} parent=0
    #allocation2 [shape = 'u8[3072]{0}', space=vmem, size = 0xc00, scoped, tag = 'input window, operand 0, single buffered']
    #allocation3 [shape = 's32[2]{0}', space=sflag, size = 0x8, scoped, tag = 'scoped memory for tpu_custom_call.1']
    #allocation4 [shape = 's32[2]{0}', space=sflag, size = 0x8, scoped, tag = 'scoped memory for tpu_custom_call.1']
    #allocation5 [shape = 'u8[49152]{0}', space=vmem, size = 0xc000, scoped, tag = 'output window, operand 0']
    %6 = vsyncpa [#allocation3], 0
    %7 = vsyncpa [#allocation4], 0
    %s8 = scalar_lea.sflag [#allocation4], 1
    %9 = vsyncpa %s8, 0
    loop: start=0, step=1, limit=4
    $region2: #{tpu_custom_call.1} parent=1 // loop_pre_header
      _
    $region3: #{tpu_custom_call.1} parent=1 // loop_header
      %s11 = sphi 0, %s15
      %p12 = scmp.ge.s32.totalorder %s11, 4
      %s19 = sphi 0, %s19
      %s21 = sphi 0, %s19
      %s22 = sphi 0, %s21
      %s36 = sphi 0, %s22
      %s42 = sphi 0, %s44
      %s45 = sphi 0, %s42
      %s46 = sphi 0, %s45
      %s62 = sphi 0, %s46
    $region4: #{tpu_custom_call.1} parent=1 // loop_header_branch
      %14 = sbr.rel (%p12) target = $region8
    $region5: #{tpu_custom_call.1} parent=1 // loop_body
      %s16 = ssub.s32 %s11, 1
      %s17 = ssub.s32 %s11, 2
      %s18 = sadd.s32 %s11, 1
      %s20 = sadd.s32 %s19, 1
      %p23 = scmp.eq.s32.totalorder %s11, 1
      %p24 = scmp.ne.s32.totalorder %s19, %s21
      %p25 = scmp.eq.s32.totalorder %s11, 0
      %p26 = por %p24, %p25
      %p27 = scmp.ne.s32.totalorder %s19, %s21
      %p28 = scmp.eq.s32.totalorder %s16, 1
      %p29 = por %p27, %p28
      %p30 = scmp.ne.s32.totalorder %s21, %s22
      %p31 = scmp.eq.s32.totalorder %s16, 0
      %p32 = por %p30, %p31
      %p33 = scmp.ne.s32.totalorder %s21, %s22
      %p34 = scmp.eq.s32.totalorder %s17, 1
      %p35 = por %p33, %p34
      %p37 = scmp.ne.s32.totalorder %s22, %s36
      %p38 = scmp.eq.s32.totalorder %s17, 0
      %p39 = por %p37, %p38
      %s40 = ssub.s32 %s11, %s18
      %p41 = scmp.eq.s32.totalorder %s40, 0
      %s43 = sadd.s32 %s42, 1
      %s44 = scalar_select %p41, %s42, %s43
      %p47 = pneg %p41
      %p48 = scmp.eq.s32.totalorder %s11, 1
      %p49 = por %p47, %p48
      %p50 = scmp.ne.s32.totalorder %s42, %s45
      %p51 = scmp.eq.s32.totalorder %s11, 0
      %p52 = por %p50, %p51
      %p53 = scmp.ne.s32.totalorder %s42, %s45
      %p54 = scmp.eq.s32.totalorder %s16, 1
      %p55 = por %p53, %p54
      %p56 = scmp.ne.s32.totalorder %s45, %s46
      %p57 = scmp.eq.s32.totalorder %s16, 0
      %p58 = por %p56, %p57
      %p59 = scmp.ne.s32.totalorder %s45, %s46
      %p60 = scmp.eq.s32.totalorder %s17, 1
      %p61 = por %p59, %p60
      %p63 = scmp.ne.s32.totalorder %s46, %s62
      %p64 = scmp.eq.s32.totalorder %s17, 0
      %p65 = por %p63, %p64
      %p66 = scmp.le.s32.totalorder 1, %s11
      %p67 = scmp.lt.s32.totalorder %s11, 3
      %p68 = pnand %p66, %p67
      %p69 = pneg %p68
      // Predicated region
      $region9: #{tpu_custom_call.1} parent=5 // pred_check
        _
      $region10: #{tpu_custom_call.1} parent=5 // pred_check_branch
        %71 = sbr.rel (%p68) target = $region12
      $region11: #{tpu_custom_call.1} parent=5 // pred_region
        %s72 = ssub.s32 %s11, 1
        // Predicated region
        $region13: #{tpu_custom_call.1} parent=11 // pred_check
          %p73 = pneg %p32
        $region14: #{tpu_custom_call.1} parent=11 // pred_check_branch
          %75 = sbr.rel (%p73) target = $region16
        $region15: #{tpu_custom_call.1} parent=11 // pred_region
          %s77 = ssub.s32 96, 96
          %78 = vsyncadd [#allocation3], %s77
          %s80 = sshll.u32 [#allocation2], 4
          %s81 = int_to_ptr.vmem [resolvable:$true] %s80
          %83 = dma.hbm_to_vmem [thread:$0]  %s0, 96, %s81, [#allocation3]
        $region16: #{tpu_custom_call.1} parent=11 // pred_fallthru
          _
      $region12: #{tpu_custom_call.1} parent=5 // pred_fallthru
        _
      %p84 = scmp.lt.s32.totalorder %s11, 2
      // Predicated region
      $region17: #{tpu_custom_call.1} parent=5 // pred_check
        %p85 = pneg %p84
      $region18: #{tpu_custom_call.1} parent=5 // pred_check_branch
        %87 = sbr.rel (%p85) target = $region20
      $region19: #{tpu_custom_call.1} parent=5 // pred_region
        _
      $region20: #{tpu_custom_call.1} parent=5 // pred_fallthru
        _
      %p88 = scmp.le.s32.totalorder 1, %s11
      %p89 = scmp.lt.s32.totalorder %s11, 3
      %p90 = pnand %p88, %p89
      %p91 = pneg %p90
      // Predicated region
      $region21: #{tpu_custom_call.1} parent=5 // pred_check
        _
      $region22: #{tpu_custom_call.1} parent=5 // pred_check_branch
        %93 = sbr.rel (%p90) target = $region24
      $region23: #{tpu_custom_call.1} parent=5 // pred_region
        %s94 = ssub.s32 %s11, 1
        // Predicated region
        $region25: #{tpu_custom_call.1} parent=23 // pred_check
          %p95 = pneg %p32
        $region26: #{tpu_custom_call.1} parent=23 // pred_check_branch
          %97 = sbr.rel (%p95) target = $region28
        $region27: #{tpu_custom_call.1} parent=23 // pred_region
          %98 = dma.done [#allocation3], 96
        $region28: #{tpu_custom_call.1} parent=23 // pred_fallthru
          _
        %p99 = pneg %p32
        %p100 = pneg %p29
        %p101 = pneg %p58
        %p102 = pneg %p55
        %s103 = sand.u32 %s45, 1
        %s104 = scalar_lea.sflag [#allocation4], %s103
        %s105 = sand.u32 %s45, 1
        %s106 = smul.addr %s105, 48
        %s107 = scalar_lea.vmem [#allocation5], %s106
        %s108 = smul.u32 2, %s16
        %s109 = ssub.s32 3, %s108
        %p110 = scmp.lt.s32.totalorder %s109, 2
        %s111 = scalar_select %p110, %s109, 2
        %s112 = smul.u32 128, %s111
        %s113 = smul.u32 %s112, 3
        %s114 = smul.u32 %s16, 16
        %v115 = vlaneseq
        %v116 = vshrl.u32 %v115, 7
        %v117 = vadd.s32 %v116, 8
        %v118 = vstv %s114
        %v119 = vadd.s32 %v116, %v118
        %v120 = vadd.s32 %v117, %v118
        %v121 = vcvt.s32.f32 %v119
        %v122 = vcvt.s32.f32 %v120
        %v123 = vld [vmem:[#allocation2] sm:$0x3f]
        %v125 = vlaneseq
        %v126 = vshrl.u32 %v125, 7
        %v127 = vsub.s32 1, %v126
        %v128 = vrot.slane %v123, %v127
        %v129 = vlaneseq
        %v130 = vshrl.u32 %v129, 7
        %v131 = vsub.s32 3, %v130
        %v132 = vrot.slane %v123, %v131
        %v133 = vlaneseq
        %v134 = vshrl.u32 %v133, 7
        %v135 = vsub.s32 5, %v134
        %v136 = vrot.slane %v123, %v135
        %v140 = vlaneseq
        %v141 = vshrl.u32 %v140, 7
        %v142 = vsub.s32 1, %v141
        %v143 = vrot.slane %v128, %v142
        %v144 = vlaneseq
        %v145 = vshrl.u32 %v144, 7
        %v146 = vsub.s32 1, %v145
        %v147 = vrot.slane %v132, %v146
        %v148 = vlaneseq
        %v149 = vshrl.u32 %v148, 7
        %v150 = vsub.s32 1, %v149
        %v151 = vrot.slane %v136, %v150
        %v152 = vmul.f32 %v121, %v143
        %v153 = vmul.f32 %v121, %v147
        %v154 = vmul.f32 %v121, %v151
        %v155 = vmul.f32 %v122, %v143
        %v156 = vmul.f32 %v122, %v147
        %v157 = vmul.f32 %v122, %v151
        %v158 = vlaneseq
        %v159 = vshrl.u32 %v158, 7
        %v160 = vsub.s32 0, %v159
        %v161 = vrot.slane %v123, %v160
        %v162 = vlaneseq
        %v163 = vshrl.u32 %v162, 7
        %v164 = vsub.s32 2, %v163
        %v165 = vrot.slane %v123, %v164
        %v166 = vlaneseq
        %v167 = vshrl.u32 %v166, 7
        %v168 = vsub.s32 4, %v167
        %v169 = vrot.slane %v123, %v168
        %v173 = vlaneseq
        %v174 = vshrl.u32 %v173, 7
        %v175 = vsub.s32 0, %v174
        %v176 = vrot.slane %v161, %v175
        %v177 = vlaneseq
        %v178 = vshrl.u32 %v177, 7
        %v179 = vsub.s32 0, %v178
        %v180 = vrot.slane %v165, %v179
        %v181 = vlaneseq
        %v182 = vshrl.u32 %v181, 7
        %v183 = vsub.s32 0, %v182
        %v184 = vrot.slane %v169, %v183
        %v185 = vadd.f32 %v176, %v152
        %v186 = vadd.f32 %v180, %v153
        %v187 = vadd.f32 %v184, %v154
        %v188 = vadd.f32 %v176, %v155
        %v189 = vadd.f32 %v180, %v156
        %v190 = vadd.f32 %v184, %v157
        %191 = vst [vmem:[%s107] sm:$0xff] %v185
        %192 = vst [vmem:[%s107 + $0x8] sm:$0xff] %v186
        %vm193 = vcmask 261120
        %194 = vst.msk [vmem:[%s107 + $0x10] sm:$0xff] %vm193, %v187
        %195 = vst [vmem:[%s107 + $0x18] sm:$0xff] %v188
        %196 = vst [vmem:[%s107 + $0x20] sm:$0xff] %v189
        %197 = vst.msk [vmem:[%s107 + $0x28] sm:$0xff] %vm193, %v190
        %s198 = sand.u32 %s45, 1
        %s199 = scalar_lea.sflag [#allocation4], %s198
        %s200 = sand.u32 %s45, 1
        %s201 = smul.addr %s200, 48
        %s202 = scalar_lea.vmem [#allocation5], %s201
        // Predicated region
        $region29: #{tpu_custom_call.1} parent=23 // pred_check
          %p203 = pneg %p55
        $region30: #{tpu_custom_call.1} parent=23 // pred_check_branch
          %205 = sbr.rel (%p203) target = $region32
        $region31: #{tpu_custom_call.1} parent=23 // pred_region
          %s206 = smul.u32 2, %s16
          %s207 = ssub.s32 3, %s206
          %p208 = scmp.lt.s32.totalorder %s207, 2
          %s209 = scalar_select %p208, %s207, 2
          %s210 = smul.u32 128, %s209
          %s211 = smul.u32 %s210, 3
          %s213 = ssub.s32 768, %s211
          %214 = vsyncadd %s199, %s213
          %p215 = scmp.ne.s32.totalorder 0, %s211
          %s216 = smul.addr %s206, 3
          %s217 = smul.addr %s216, 128
          %s218 = scalar_lea.hbm %s1, %s217
          %s219 = smul.u32 24, %s209
          %s220 = sshll.u32 %s202, 4
          %s221 = int_to_ptr.vmem [resolvable:$true] %s220
          %s222 = sshll.u32 %s219, 4
          %226 = dma.vmem_to_hbm [thread:$0]  (%p215), %s221, %s222, %s218, %s199, 384, 384, 24
        $region32: #{tpu_custom_call.1} parent=23 // pred_fallthru
          _
      $region24: #{tpu_custom_call.1} parent=5 // pred_fallthru
        _
      %p227 = scmp.le.s32.totalorder 2, %s11
      // Predicated region
      $region33: #{tpu_custom_call.1} parent=5 // pred_check
        %p228 = pneg %p227
      $region34: #{tpu_custom_call.1} parent=5 // pred_check_branch
        %230 = sbr.rel (%p228) target = $region36
      $region35: #{tpu_custom_call.1} parent=5 // pred_region
        %s231 = ssub.s32 %s11, 2
        // Predicated region
        $region37: #{tpu_custom_call.1} parent=35 // pred_check
          %p232 = pneg %p61
        $region38: #{tpu_custom_call.1} parent=35 // pred_check_branch
          %234 = sbr.rel (%p232) target = $region40
        $region39: #{tpu_custom_call.1} parent=35 // pred_region
          %s235 = sand.u32 %s46, 1
          %s236 = scalar_lea.sflag [#allocation4], %s235
          %s237 = sand.u32 %s46, 1
          %s238 = smul.addr %s237, 48
          %s239 = scalar_lea.vmem [#allocation5], %s238
          %240 = dma.done %s236, 768
        $region40: #{tpu_custom_call.1} parent=35 // pred_fallthru
          _
      $region36: #{tpu_custom_call.1} parent=5 // pred_fallthru
        _
    $region6: #{tpu_custom_call.1} parent=1 // loop_footer
      %s15 = sadd.s32 1, %s11
    $region7: #{tpu_custom_call.1} parent=1 // loop_footer_branch
      %10 = sbr.rel target = $region3
    $region8: #{tpu_custom_call.1} parent=1 // loop_exit
      _
    %241 = vsyncpa [#allocation3], 1
    %s242 = scalar_lea.sflag [#allocation3], 1
    %243 = vsyncpa %s242, 1
    %244 = vsyncpa [#allocation4], 1
    %s245 = scalar_lea.sflag [#allocation4], 1
    %246 = vsyncpa %s245, 1

</llo_original>
